<compile_context>
chip_gen: v7x
topology: tpu7x:2x2x1
jax: 0.10.0
libtpu: 0.0.40
codegen_flags: <defaults>
</compile_context>

<pallas_src>
import functools
import math
import numpy as np
import jax
import jax.numpy as jnp
from jax import lax
from jax.experimental import pallas as pl
from jax.experimental.pallas import tpu as pltpu

# ---------------- configuration (small shapes consistent with the module) ----
B = 2
C_IN = 8
C_OUT = 8
K = 3
STRIDE = 2
OUT_PAD = 1
IMG = 16                 # img_size (deconv output spatial size)
H_IN = 8                 # (8-1)*2 - 2*1 + 3 + 1 = 16  ✓
SEQ = 8
SEQ_DIM = 512            # fixed by the module (nn.Linear(512, ...))
PAD = K // 2
C4 = C_OUT // 4
HW = IMG * IMG
KKC = K * K * C_IN       # 72, im2col contraction size
PAD_LO = K - 1 - PAD     # 1
PAD_HI = K - 1 - PAD + OUT_PAD   # 2
SKV_W = 16               # lane-padded width of the precomputed seq k/v slab
QCHUNK = 128             # attention-2 query chunk (keeps (256,128) logits in-register)
EPS = 1e-5
BF16 = jnp.bfloat16
F32 = jnp.float32


# ---------------- shared in-kernel helper ------------------------------------
def _ln_all_lrelu(x, g, b):
    """LayerNorm over the whole (C, HW) tensor (single traversal) + LeakyReLU(0.1)."""
    mu = jnp.mean(x)
    var = jnp.mean(x * x) - mu * mu
    y = (x - mu) * lax.rsqrt(var + EPS) * g + b
    return jnp.where(y >= 0, y, 0.1 * y)


# ---------------- kernel (attn=False): deconv + LN + LeakyReLU ----------------
def deconv_ln_kernel(cols_ref, wc_ref, par_ref, out_ref, *, nb):
    wc = wc_ref[...]                                   # (C_OUT, KKC) bf16
    par = par_ref[...]                                 # (3*C_OUT, HW) f32
    g1, b1, dec_b = par[:C_OUT], par[C_OUT:2 * C_OUT], par[2 * C_OUT:3 * C_OUT]
    for i in range(nb):
        x1 = jnp.dot(wc, cols_ref[i], preferred_element_type=F32) + dec_b
        out_ref[i] = _ln_all_lrelu(x1, g1, b1)


# ---------------- fused kernel (attn=True) ------------------------------------
def fused_decoder_kernel(cols_ref, skv_ref, wc_ref, wimg_ref, par_ref, out_ref, *, nb):
    wc = wc_ref[...]                                   # (C_OUT, KKC)       bf16
    wimg = wimg_ref[...]                               # (C_OUT + C4, C_OUT) bf16
    par = par_ref[...]                                 # (7*C_OUT, HW)      f32
    g1     = par[0 * C_OUT:1 * C_OUT]
    b1     = par[1 * C_OUT:2 * C_OUT]
    dec_b  = par[2 * C_OUT:3 * C_OUT]
    attn_g = par[3 * C_OUT:4 * C_OUT]
    attn_b = par[4 * C_OUT:5 * C_OUT]
    k1_b   = par[5 * C_OUT:6 * C_OUT]
    q1_b   = par[6 * C_OUT:6 * C_OUT + C4]

    inv_sq_c4 = 1.0 / math.sqrt(C4)
    inv_sq_c = 1.0 / math.sqrt(C_OUT)

    for i in range(nb):
        # --- deconv (single im2col matmul, bf16 operands) + LN(C,H,W) + LReLU --
        x1 = jnp.dot(wc, cols_ref[i], preferred_element_type=F32) + dec_b
        x1 = _ln_all_lrelu(x1, g1, b1)                                # (C_OUT, HW) f32
        x1b = x1.astype(BF16)

        # --- packed image projections: rows [k1 ; q] -> lane-dense -------------
        qk = jnp.dot(wimg, x1b, preferred_element_type=F32)           # (C_OUT+C4, HW)
        k1T = qk[:C_OUT] + k1_b                                        # (C_OUT, HW)
        qT = qk[C_OUT:] + q1_b                                         # (C4, HW)

        # --- attention 1 (keys/values from precomputed seq projections) --------
        # TODO(synk): nn.Dropout(p=0.1) on attention weights is identity in eval mode.
        skv = skv_ref[i]                                               # (SEQ, 16) f32
        seq_k = (skv[:, :C4] * inv_sq_c4).astype(BF16)                 # (SEQ, C4)
        seq_vT = skv[:, C4:C4 + C_OUT].T.astype(BF16)                  # (C_OUT, SEQ)
        s1 = jnp.dot(seq_k, qT.astype(BF16), preferred_element_type=F32)   # (SEQ, HW)
        e1 = jnp.exp(s1 - jnp.max(s1, axis=0, keepdims=True))
        r1 = pl.reciprocal(jnp.sum(e1, axis=0, keepdims=True), approx=True)
        ctxT = jnp.dot(seq_vT, e1.astype(BF16), preferred_element_type=F32) * r1

        # --- residual + attn_LN1 over channels (sublane reduction) -------------
        z = ctxT + x1
        mu_c = jnp.mean(z, axis=0, keepdims=True)
        var_c = jnp.mean(z * z, axis=0, keepdims=True) - mu_c * mu_c
        ax1 = (z - mu_c) * lax.rsqrt(var_c + EPS) * attn_g + attn_b    # (C_OUT, HW)

        # --- attention 2, transposed + chunked along queries -------------------
        #   s2T[k, q] = <image_k1[k], attn_x1[q]> / sqrt(C);  softmax over k
        #   oT = x1 @ softmax(s2T)                 -> (C_OUT, HW), lane-dense
        ax1b = (ax1 * inv_sq_c).astype(BF16)                           # (C_OUT, HW)
        k1_rows = k1T.T.astype(BF16)                                   # (HW, C_OUT), one transpose
        o_chunks = []
        for c0 in range(0, HW, QCHUNK):
            s2 = jnp.dot(k1_rows, ax1b[:, c0:c0 + QCHUNK],
                         preferred_element_type=F32)                   # (HW_k, QCHUNK)
            e2 = jnp.exp(s2 - jnp.max(s2, axis=0, keepdims=True))
            r2 = pl.reciprocal(jnp.sum(e2, axis=0, keepdims=True), approx=True)
            o_chunks.append(
                jnp.dot(x1b, e2.astype(BF16), preferred_element_type=F32) * r2)
        oT = jnp.concatenate(o_chunks, axis=1)                         # (C_OUT, HW)

        # --- final LN1 (shared parameters) + LeakyReLU --------------------------
        out_ref[i] = _ln_all_lrelu(oT, g1, b1)


# ---------------- one-time parameter packing (NOT in the per-call path) -------
def pack_params(p):
    """Weight flips/transposes, lane-dense pre-broadcast bias/LN slabs, bf16 casts."""
    w_eff = jnp.transpose(p['deconv_w'], (2, 3, 0, 1))[::-1, ::-1]     # (K,K,Cin,Cout) flipped
    wc = jnp.transpose(w_eff, (3, 0, 1, 2)).reshape(C_OUT, KKC)

    def bc(v):
        return jnp.broadcast_to(v.astype(F32)[:, None], (C_OUT, HW))

    par = jnp.concatenate([
        p['ln1_g'].reshape(C_OUT, HW).astype(F32),
        p['ln1_b'].reshape(C_OUT, HW).astype(F32),
        bc(p['deconv_b']),
        bc(p['attn_ln_g']),
        bc(p['attn_ln_b']),
        bc(p['image_k1_b']),
        bc(jnp.pad(p['image_q1_b'], (0, C_OUT - C4))),
    ], axis=0)                                                          # (7*C_OUT, HW)

    w_seq = jnp.concatenate([p['seq_k_w'].T, p['seq_v_w'].T], axis=1)   # (512, C4+C_OUT)
    b_seq = jnp.concatenate([p['seq_k_b'], p['seq_v_b']])
    return {
        'wc': wc.astype(BF16),
        'wimg': jnp.concatenate([p['image_k1_w'], p['image_q1_w']], axis=0).astype(BF16),
        'par': par,
        'par3': par[:3 * C_OUT],
        'w_seq': jnp.pad(w_seq, ((0, 0), (0, SKV_W - (C4 + C_OUT)))).astype(F32),
        'b_seq': jnp.pad(b_seq, (0, SKV_W - (C4 + C_OUT))).reshape(1, 1, SKV_W).astype(F32),
    }


def default_batch_block():
    """Single grid step covering the whole batch on single-TensorCore chips
    (v5e / v6e); one batch element per 'parallel' grid step elsewhere (v7x /
    megacore) so both TensorCores are used."""
    try:
        kind = jax.devices()[0].device_kind.lower()
    except Exception:
        return 1
    if any(s in kind for s in ("v5 lite", "v5e", "v6 lite", "v6e")):
        return B
    return 1


# ---------------- wrapper-side glue -------------------------------------------
def _im2col_bf16(x_nchw):
    """ConvTranspose2d -> stride-1 conv glue in bf16: one lax.pad (interior padding
    does the stride-2 dilation) + 3x3 im2col, channels-first so H*W lands in the
    TPU lane dimension.  Returns (B, K*K*C_IN, HW) bf16."""
    xp = lax.pad(x_nchw.astype(BF16), jnp.array(0, BF16),
                 ((0, 0, 0), (0, 0, 0),
                  (PAD_LO, PAD_HI, STRIDE - 1), (PAD_LO, PAD_HI, STRIDE - 1)))   # (B,C_IN,18,18)
    # TODO(synk): the 9-tap slice/concat could be folded into the kernel with
    # in-VMEM relayouts; kept as a single small XLA fusion for lowering robustness.
    return jnp.concatenate(
        [xp[:, :, kh:kh + IMG, kw:kw + IMG].reshape(B, C_IN, HW)
         for kh in range(K) for kw in range(K)], axis=1)                          # (B, KKC, HW)


@functools.partial(jax.jit, static_argnames=("attn", "batch_block"))
def decoder_block_forward(x_nchw, seq_feat, packed, attn=True, batch_block=1):
    nb = batch_block
    assert B % nb == 0
    cols = _im2col_bf16(x_nchw)
    cparams = pltpu.CompilerParams(dimension_semantics=("parallel",))
    grid = (B // nb,)

    if not attn:
        out = pl.pallas_call(
            functools.partial(deconv_ln_kernel, nb=nb),
            out_shape=jax.ShapeDtypeStruct((B, C_OUT, HW), F32),
            grid_spec=pltpu.PrefetchScalarGridSpec(
                num_scalar_prefetch=0,
                grid=grid,
                in_specs=[
                    pl.BlockSpec((nb, KKC, HW), lambda i: (i, 0, 0)),
                    pl.BlockSpec((C_OUT, KKC), lambda i: (0, 0)),
                    pl.BlockSpec((3 * C_OUT, HW), lambda i: (0, 0)),
                ],
                out_specs=pl.BlockSpec((nb, C_OUT, HW), lambda i: (i, 0, 0)),
            ),
            compiler_params=cparams,
        )(cols, packed['wc'], packed['par3'])
        return out.reshape(B, C_OUT, IMG, IMG)

    # seq_k / seq_v projections precomputed once for the whole batch (tiny dot)
    skv = jnp.matmul(seq_feat.astype(F32), packed['w_seq']) + packed['b_seq']   # (B, SEQ, 16)

    out = pl.pallas_call(
        functools.partial(fused_decoder_kernel, nb=nb),
        out_shape=jax.ShapeDtypeStruct((B, C_OUT, HW), F32),
        grid_spec=pltpu.PrefetchScalarGridSpec(
            num_scalar_prefetch=0,
            grid=grid,
            in_specs=[
                pl.BlockSpec((nb, KKC, HW), lambda i: (i, 0, 0)),
                pl.BlockSpec((nb, SEQ, SKV_W), lambda i: (i, 0, 0)),
                pl.BlockSpec((C_OUT, KKC), lambda i: (0, 0)),
                pl.BlockSpec((C_OUT + C4, C_OUT), lambda i: (0, 0)),
                pl.BlockSpec((7 * C_OUT, HW), lambda i: (0, 0)),
            ],
            out_specs=pl.BlockSpec((nb, C_OUT, HW), lambda i: (i, 0, 0)),
        ),
        compiler_params=cparams,
    )(cols, skv, packed['wc'], packed['wimg'], packed['par'])
    return out.reshape(B, C_OUT, IMG, IMG)


# ---------------- deterministic parameter init --------------------------------
def init_params(key):
    ks = jax.random.split(key, 12)
    p = {}
    p['deconv_w'] = jax.random.normal(ks[0], (C_IN, C_OUT, K, K), F32) * 0.1
    p['deconv_b'] = jax.random.normal(ks[1], (C_OUT,), F32) * 0.1
    p['ln1_g'] = 1.0 + 0.05 * jax.random.normal(ks[2], (C_OUT, IMG, IMG), F32)
    p['ln1_b'] = 0.05 * jax.random.normal(ks[3], (C_OUT, IMG, IMG), F32)
    p['seq_k_w'] = jax.random.normal(ks[4], (C4, SEQ_DIM), F32) * 0.05
    p['seq_k_b'] = jax.random.normal(ks[5], (C4,), F32) * 0.05
    p['seq_v_w'] = jax.random.normal(ks[6], (C_OUT, SEQ_DIM), F32) * 0.05
    p['seq_v_b'] = jax.random.normal(ks[7], (C_OUT,), F32) * 0.05
    p['image_q1_w'] = jax.random.normal(ks[8], (C4, C_OUT), F32) * 0.1
    p['image_q1_b'] = jnp.zeros((C4,), F32)
    p['image_k1_w'] = jax.random.normal(ks[9], (C_OUT, C_OUT), F32) * 0.1
    p['image_k1_b'] = jnp.zeros((C_OUT,), F32)
    p['attn_ln_g'] = 1.0 + 0.05 * jax.random.normal(ks[10], (C_OUT,), F32)
    p['attn_ln_b'] = 0.05 * jax.random.normal(ks[11], (C_OUT,), F32)
    return p


# ---------------- independent numpy reference (PyTorch semantics, eval mode) --
def reference_forward(x, seq_feat, p, attn=True):
    x = np.asarray(x, np.float32)
    seq_feat = np.asarray(seq_feat, np.float32)
    Wd = np.asarray(p['deconv_w']); bd = np.asarray(p['deconv_b'])
    out = np.zeros((B, C_OUT, IMG, IMG), np.float32)
    for ih in range(H_IN):
        for iw in range(H_IN):
            for kh in range(K):
                for kw in range(K):
                    oh = ih * STRIDE - PAD + kh
                    ow = iw * STRIDE - PAD + kw
                    if 0 <= oh < IMG and 0 <= ow < IMG:
                        out[:, :, oh, ow] += x[:, :, ih, iw] @ Wd[:, :, kh, kw]
    out += bd[None, :, None, None]
    g1 = np.asarray(p['ln1_g']); b1 = np.asarray(p['ln1_b'])

    def ln_chw(t):
        m = t.reshape(B, -1).mean(1).reshape(B, 1, 1, 1)
        v = t.reshape(B, -1).var(1).reshape(B, 1, 1, 1)
        return (t - m) / np.sqrt(v + EPS) * g1[None] + b1[None]

    def lrelu(t):
        return np.where(t >= 0, t, 0.1 * t)

    def softmax(s):
        e = np.exp(s - s.max(-1, keepdims=True))
        return e / e.sum(-1, keepdims=True)

    x1 = lrelu(ln_chw(out))
    if not attn:
        return x1
    sv = seq_feat @ np.asarray(p['seq_v_w']).T + np.asarray(p['seq_v_b'])
    sk = seq_feat @ np.asarray(p['seq_k_w']).T + np.asarray(p['seq_k_b'])
    x1f = x1.reshape(B, C_OUT, HW).transpose(0, 2, 1)
    q = x1f @ np.asarray(p['image_q1_w']).T + np.asarray(p['image_q1_b'])
    k1 = x1f @ np.asarray(p['image_k1_w']).T + np.asarray(p['image_k1_b'])
    a1 = softmax(q @ sk.transpose(0, 2, 1) / math.sqrt(C4)) @ sv
    z = a1 + x1f
    mu = z.mean(-1, keepdims=True); var = z.var(-1, keepdims=True)
    attn_x1 = (z - mu) / np.sqrt(var + EPS) * np.asarray(p['attn_ln_g']) + np.asarray(p['attn_ln_b'])
    a2 = softmax(attn_x1 @ k1.transpose(0, 2, 1) / math.sqrt(C_OUT)) @ x1f
    x1b = a2.transpose(0, 2, 1).reshape(B, C_OUT, IMG, IMG)
    return lrelu(ln_chw(x1b))


if __name__ == "__main__":
    key = jax.random.PRNGKey(0)
    kx, ks, kp = jax.random.split(key, 3)
    x = jax.random.normal(kx, (B, C_IN, H_IN, H_IN), F32)
    seq_feat = jax.random.normal(ks, (B, SEQ, SEQ_DIM), F32)
    params = init_params(kp)

    packed = jax.block_until_ready(pack_params(params))   # one-time packing, outside jit
    nb = default_batch_block()

    # attn=False path (deconv + LN + LeakyReLU only)
    out_na = jax.block_until_ready(
        decoder_block_forward(x, seq_feat, packed, attn=False, batch_block=nb))
    np.testing.assert_allclose(np.asarray(out_na),
                               reference_forward(x, seq_feat, params, attn=False),
                               rtol=3e-2, atol=3e-2)

    # attn=True path (full fused decoder block)
    out = jax.block_until_ready(
        decoder_block_forward(x, seq_feat, packed, attn=True, batch_block=nb))
    assert out.shape == (B, C_OUT, IMG, IMG)
    ref = reference_forward(x, seq_feat, params, attn=True)
    np.testing.assert_allclose(np.asarray(out), ref, rtol=3e-2, atol=3e-2)

    print("KERNEL_OK")
</pallas_src>

<mosaic_0001>
module attributes {stable_mosaic.version = 11 : i64} {
  func.func @deconv_ln_kernel(%arg0: i32, %arg1: memref<1x72x256xbf16, #tpu.memory_space<vmem>>, %arg2: memref<8x72xbf16, #tpu.memory_space<vmem>>, %arg3: memref<24x256xf32, #tpu.memory_space<vmem>>, %arg4: memref<1x8x256xf32, #tpu.memory_space<vmem>>) attributes {dimension_semantics = [#tpu.dimension_semantics<parallel>], iteration_bounds = array<i64: 2>, scalar_prefetch = 0 : i64, scratch_operands = 0 : i64, tpu.core_type = #tpu.core_type<tc>, window_params = [{transform_indices = @transform_0, window_bounds = array<i64: 1, 72, 256>}, {pipeline_mode = #tpu.pipeline_mode<synchronous>, transform_indices = @transform_1, window_bounds = array<i64: 8, 72>}, {pipeline_mode = #tpu.pipeline_mode<synchronous>, transform_indices = @transform_2, window_bounds = array<i64: 24, 256>}, {transform_indices = @transform_3, window_bounds = array<i64: 1, 8, 256>}]} {
    %c0 = arith.constant 0 : index
    %c0_0 = arith.constant 0 : index
    %0 = vector.load %arg2[%c0, %c0_0] : memref<8x72xbf16, #tpu.memory_space<vmem>>, vector<8x72xbf16>
    %c0_1 = arith.constant 0 : index
    %c0_2 = arith.constant 0 : index
    %1 = vector.load %arg3[%c0_1, %c0_2] : memref<24x256xf32, #tpu.memory_space<vmem>>, vector<24x256xf32>
    %2 = vector.extract_strided_slice %1 {offsets = [0, 0], sizes = [8, 256], strides = [1, 1]} : vector<24x256xf32> to vector<8x256xf32>
    %3 = vector.extract_strided_slice %1 {offsets = [8, 0], sizes = [8, 256], strides = [1, 1]} : vector<24x256xf32> to vector<8x256xf32>
    %4 = vector.extract_strided_slice %1 {offsets = [16, 0], sizes = [8, 256], strides = [1, 1]} : vector<24x256xf32> to vector<8x256xf32>
    %c0_3 = arith.constant 0 : index
    %c0_4 = arith.constant 0 : index
    %c0_5 = arith.constant 0 : index
    %5 = vector.load %arg1[%c0_3, %c0_4, %c0_5] : memref<1x72x256xbf16, #tpu.memory_space<vmem>>, vector<1x72x256xbf16>
    %6 = vector.shape_cast %5 : vector<1x72x256xbf16> to vector<72x256xbf16>
    %cst = arith.constant dense<0.000000e+00> : vector<8x256xf32>
    %7 = tpu.matmul %0, %6, %cst {dimension_numbers = #tpu.dot_dimension_numbers<[1], [0], [0], [1], [0, 0, 1, 1], [], []>} : vector<8x72xbf16>, vector<72x256xbf16>, vector<8x256xf32> -> vector<8x256xf32>
    %8 = arith.addf %7, %4 : vector<8x256xf32>
    %9 = vector.shape_cast %8 : vector<8x256xf32> to vector<1x8x256xf32>
    %cst_6 = arith.constant dense<0.000000e+00> : vector<1xf32>
    %10 = vector.multi_reduction <add>, %9, %cst_6 [1, 2] : vector<1x8x256xf32> to vector<1xf32>
    %11 = vector.shape_cast %10 : vector<1xf32> to vector<1x1x1xf32>
    %12 = vector.extract %11[0, 0, 0] : f32 from vector<1x1x1xf32>
    %cst_7 = arith.constant 2.048000e+03 : f32
    %13 = arith.divf %12, %cst_7 : f32
    %14 = arith.mulf %8, %8 : vector<8x256xf32>
    %15 = vector.shape_cast %14 : vector<8x256xf32> to vector<1x8x256xf32>
    %cst_8 = arith.constant dense<0.000000e+00> : vector<1xf32>
    %16 = vector.multi_reduction <add>, %15, %cst_8 [1, 2] : vector<1x8x256xf32> to vector<1xf32>
    %17 = vector.shape_cast %16 : vector<1xf32> to vector<1x1x1xf32>
    %18 = vector.extract %17[0, 0, 0] : f32 from vector<1x1x1xf32>
    %cst_9 = arith.constant 2.048000e+03 : f32
    %19 = arith.divf %18, %cst_9 : f32
    %20 = arith.mulf %13, %13 : f32
    %21 = arith.subf %19, %20 : f32
    %22 = vector.broadcast %13 : f32 to vector<8x256xf32>
    %23 = arith.subf %8, %22 : vector<8x256xf32>
    %cst_10 = arith.constant 9.99999974E-6 : f32
    %24 = arith.addf %21, %cst_10 : f32
    %25 = math.rsqrt %24 : f32
    %26 = vector.broadcast %25 : f32 to vector<8x256xf32>
    %27 = arith.mulf %23, %26 : vector<8x256xf32>
    %28 = arith.mulf %27, %2 : vector<8x256xf32>
    %29 = arith.addf %28, %3 : vector<8x256xf32>
    %cst_11 = arith.constant 0.000000e+00 : f32
    %30 = vector.broadcast %cst_11 : f32 to vector<8x256xf32>
    %31 = arith.cmpf oge, %29, %30 : vector<8x256xf32>
    %cst_12 = arith.constant 1.000000e-01 : f32
    %32 = vector.broadcast %cst_12 : f32 to vector<8x256xf32>
    %33 = arith.mulf %32, %29 : vector<8x256xf32>
    %34 = arith.select %31, %29, %33 : vector<8x256xi1>, vector<8x256xf32>
    %c0_13 = arith.constant 0 : index
    %c0_14 = arith.constant 0 : index
    %c0_15 = arith.constant 0 : index
    %35 = vector.load %arg4[%c0_13, %c0_14, %c0_15] : memref<1x8x256xf32, #tpu.memory_space<vmem>>, vector<1x8x256xf32>
    %36 = vector.shape_cast %35 : vector<1x8x256xf32> to vector<8x256xf32>
    %37 = vector.shape_cast %34 : vector<8x256xf32> to vector<1x8x256xf32>
    tpu.vector_store %arg4[%c0_13, %c0_14, %c0_15], %37 {strides = array<i32>} : memref<1x8x256xf32, #tpu.memory_space<vmem>>, vector<1x8x256xf32>,
    return
  }
  func.func @transform_0(%arg0: i32) -> (i32, i32, i32) {
    %c0_i32 = arith.constant 0 : i32
    %c0_i32_0 = arith.constant 0 : i32
    %c0_i32_1 = arith.constant 0 : i32
    return %arg0, %c0_i32, %c0_i32_0 : i32, i32, i32
  }
  func.func @transform_1(%arg0: i32) -> (i32, i32) {
    %c0_i32 = arith.constant 0 : i32
    %c0_i32_0 = arith.constant 0 : i32
    %c0_i32_1 = arith.constant 0 : i32
    return %c0_i32, %c0_i32_0 : i32, i32
  }
  func.func @transform_2(%arg0: i32) -> (i32, i32) {
    %c0_i32 = arith.constant 0 : i32
    %c0_i32_0 = arith.constant 0 : i32
    %c0_i32_1 = arith.constant 0 : i32
    return %c0_i32, %c0_i32_0 : i32, i32
  }
  func.func @transform_3(%arg0: i32) -> (i32, i32, i32) {
    %c0_i32 = arith.constant 0 : i32
    %c0_i32_0 = arith.constant 0 : i32
    %c0_i32_1 = arith.constant 0 : i32
    return %arg0, %c0_i32, %c0_i32_0 : i32, i32, i32
  }
}

</mosaic_0001>

<llo_original>
// kernel: decoder_block_forward.1
$region0: #{decoder_block_forward.1}
  #allocation0 [shape = 'u32[]', space=smem, size = 0x4, offset = 0x4, fixed_abs, tag = 'smem constant byte address 0x4 - core index']
  #allocation1 [shape = 'u32[144,128]{1,0:T(1,128)}', space=vmem, size = 0x12000, scoped, tag = 'internal scratch']
  %s0 = inlined_call_operand.vmem [shape: bf16[2,72,256], index: 0, kind: input, shape index: {}]
  %s1 = inlined_call_operand.vmem [shape: bf16[8,72], index: 1, kind: input, shape index: {}]
  %s2 = inlined_call_operand.vmem [shape: f32[24,256], index: 2, kind: input, shape index: {}]
  %s3 = inlined_call_operand.vmem [shape: f32[2,8,256], index: 3, kind: output, shape index: {}]
  %s4 = sld [smem:[#allocation0]]
  $region45: #{decoder_block_forward.1} parent=0
    _
  %s6 = ssub.s32 1, %s4
  %s7 = scalar_select 0, %s6, %s4
  loop: start=0, step=1, limit=4
  $region2: #{decoder_block_forward.1} parent=0 // loop_pre_header
    _
  $region3: #{decoder_block_forward.1} parent=0 // loop_header
    %s9 = sphi 0, %s13
    %p10 = scmp.ge.s32.totalorder %s9, 4
    %s19 = sphi 0, %s21
    %s22 = sphi 0, %s19
    %s23 = sphi 0, %s22
    %s39 = sphi 0, %s23
    %s43 = sphi 0, %s43
    %s45 = sphi 0, %s43
    %s46 = sphi 0, %s45
    %s60 = sphi 0, %s46
    %s64 = sphi 0, %s64
    %s66 = sphi 0, %s64
    %s67 = sphi 0, %s66
    %s81 = sphi 0, %s67
    %s87 = sphi 0, %s89
    %s90 = sphi 0, %s87
    %s91 = sphi 0, %s90
    %s107 = sphi 0, %s91
  $region4: #{decoder_block_forward.1} parent=0 // loop_header_branch
    %12 = sbr.rel (%p10) target = $region8
  $region5: #{decoder_block_forward.1} parent=0 // loop_body
    %s14 = ssub.s32 %s9, 1
    %s15 = ssub.s32 %s9, 2
    %s16 = sadd.s32 %s9, 1
    %s17 = ssub.s32 %s9, %s16
    %p18 = scmp.eq.s32.totalorder %s17, 0
    %s20 = sadd.s32 %s19, 1
    %s21 = scalar_select %p18, %s19, %s20
    %p24 = pneg %p18
    %p25 = scmp.eq.s32.totalorder %s9, 1
    %p26 = por %p24, %p25
    %p27 = scmp.ne.s32.totalorder %s19, %s22
    %p28 = scmp.eq.s32.totalorder %s9, 0
    %p29 = por %p27, %p28
    %p30 = scmp.ne.s32.totalorder %s19, %s22
    %p31 = scmp.eq.s32.totalorder %s14, 1
    %p32 = por %p30, %p31
    %p33 = scmp.ne.s32.totalorder %s22, %s23
    %p34 = scmp.eq.s32.totalorder %s14, 0
    %p35 = por %p33, %p34
    %p36 = scmp.ne.s32.totalorder %s22, %s23
    %p37 = scmp.eq.s32.totalorder %s15, 1
    %p38 = por %p36, %p37
    %p40 = scmp.ne.s32.totalorder %s23, %s39
    %p41 = scmp.eq.s32.totalorder %s15, 0
    %p42 = por %p40, %p41
    %s44 = sadd.s32 %s43, 1
    %p47 = scmp.eq.s32.totalorder %s9, 1
    %p48 = scmp.ne.s32.totalorder %s43, %s45
    %p49 = scmp.eq.s32.totalorder %s9, 0
    %p50 = por %p48, %p49
    %p51 = scmp.ne.s32.totalorder %s43, %s45
    %p52 = scmp.eq.s32.totalorder %s14, 1
    %p53 = por %p51, %p52
    %p54 = scmp.ne.s32.totalorder %s45, %s46
    %p55 = scmp.eq.s32.totalorder %s14, 0
    %p56 = por %p54, %p55
    %p57 = scmp.ne.s32.totalorder %s45, %s46
    %p58 = scmp.eq.s32.totalorder %s15, 1
    %p59 = por %p57, %p58
    %p61 = scmp.ne.s32.totalorder %s46, %s60
    %p62 = scmp.eq.s32.totalorder %s15, 0
    %p63 = por %p61, %p62
    %s65 = sadd.s32 %s64, 1
    %p68 = scmp.eq.s32.totalorder %s9, 1
    %p69 = scmp.ne.s32.totalorder %s64, %s66
    %p70 = scmp.eq.s32.totalorder %s9, 0
    %p71 = por %p69, %p70
    %p72 = scmp.ne.s32.totalorder %s64, %s66
    %p73 = scmp.eq.s32.totalorder %s14, 1
    %p74 = por %p72, %p73
    %p75 = scmp.ne.s32.totalorder %s66, %s67
    %p76 = scmp.eq.s32.totalorder %s14, 0
    %p77 = por %p75, %p76
    %p78 = scmp.ne.s32.totalorder %s66, %s67
    %p79 = scmp.eq.s32.totalorder %s15, 1
    %p80 = por %p78, %p79
    %p82 = scmp.ne.s32.totalorder %s67, %s81
    %p83 = scmp.eq.s32.totalorder %s15, 0
    %p84 = por %p82, %p83
    %s85 = ssub.s32 %s9, %s16
    %p86 = scmp.eq.s32.totalorder %s85, 0
    %s88 = sadd.s32 %s87, 1
    %s89 = scalar_select %p86, %s87, %s88
    %p92 = pneg %p86
    %p93 = scmp.eq.s32.totalorder %s9, 1
    %p94 = por %p92, %p93
    %p95 = scmp.ne.s32.totalorder %s87, %s90
    %p96 = scmp.eq.s32.totalorder %s9, 0
    %p97 = por %p95, %p96
    %p98 = scmp.ne.s32.totalorder %s87, %s90
    %p99 = scmp.eq.s32.totalorder %s14, 1
    %p100 = por %p98, %p99
    %p101 = scmp.ne.s32.totalorder %s90, %s91
    %p102 = scmp.eq.s32.totalorder %s14, 0
    %p103 = por %p101, %p102
    %p104 = scmp.ne.s32.totalorder %s90, %s91
    %p105 = scmp.eq.s32.totalorder %s15, 1
    %p106 = por %p104, %p105
    %p108 = scmp.ne.s32.totalorder %s91, %s107
    %p109 = scmp.eq.s32.totalorder %s15, 0
    %p110 = por %p108, %p109
    %p111 = scmp.le.s32.totalorder 1, %s9
    %p112 = scmp.lt.s32.totalorder %s9, 3
    %p113 = pnand %p111, %p112
    %p114 = pneg %p113
    // Predicated region
    $region9: #{decoder_block_forward.1} parent=5 // pred_check
      _
    $region10: #{decoder_block_forward.1} parent=5 // pred_check_branch
      %116 = sbr.rel (%p113) target = $region12
    $region11: #{decoder_block_forward.1} parent=5 // pred_region
      %s117 = ssub.s32 %s9, 1
      // Predicated region
      $region13: #{decoder_block_forward.1} parent=11 // pred_check
        %p118 = pneg %p56
      $region14: #{decoder_block_forward.1} parent=11 // pred_check_branch
        %120 = sbr.rel (%p118) target = $region16
      $region15: #{decoder_block_forward.1} parent=11 // pred_region
        _
      $region16: #{decoder_block_forward.1} parent=11 // pred_fallthru
        _
      // Predicated region
      $region17: #{decoder_block_forward.1} parent=11 // pred_check
        %p121 = pneg %p77
      $region18: #{decoder_block_forward.1} parent=11 // pred_check_branch
        %123 = sbr.rel (%p121) target = $region20
      $region19: #{decoder_block_forward.1} parent=11 // pred_region
        _
      $region20: #{decoder_block_forward.1} parent=11 // pred_fallthru
        _
    $region12: #{decoder_block_forward.1} parent=5 // pred_fallthru
      _
    %p124 = scmp.lt.s32.totalorder %s9, 2
    // Predicated region
    $region21: #{decoder_block_forward.1} parent=5 // pred_check
      %p125 = pneg %p124
    $region22: #{decoder_block_forward.1} parent=5 // pred_check_branch
      %127 = sbr.rel (%p125) target = $region24
    $region23: #{decoder_block_forward.1} parent=5 // pred_region
      // Predicated region
      $region25: #{decoder_block_forward.1} parent=23 // pred_check
        %p128 = pneg %p29
      $region26: #{decoder_block_forward.1} parent=23 // pred_check_branch
        %130 = sbr.rel (%p128) target = $region28
      $region27: #{decoder_block_forward.1} parent=23 // pred_region
        %p131 = scmp.lt.s32.totalorder %s9, 1
        %s132 = scalar_select %p131, %s9, 1
        %s133 = smul.addr %s132, 18
        %s134 = smul.addr %s133, 4
        %s135 = scalar_lea.vmem %s0, %s134
      $region28: #{decoder_block_forward.1} parent=23 // pred_fallthru
        _
    $region24: #{decoder_block_forward.1} parent=5 // pred_fallthru
      _
    %p136 = scmp.le.s32.totalorder 1, %s9
    %p137 = scmp.lt.s32.totalorder %s9, 3
    %p138 = pnand %p136, %p137
    %p139 = pneg %p138
    // Predicated region
    $region29: #{decoder_block_forward.1} parent=5 // pred_check
      _
    $region30: #{decoder_block_forward.1} parent=5 // pred_check_branch
      %141 = sbr.rel (%p138) target = $region32
    $region31: #{decoder_block_forward.1} parent=5 // pred_region
      %s142 = ssub.s32 %s9, 1
      %p143 = scmp.lt.s32.totalorder %s14, 1
      %s144 = scalar_select %p143, %s14, 1
      %s145 = smul.addr %s144, 18
      %s146 = smul.addr %s145, 4
      %s147 = scalar_lea.vmem %s0, %s146
      %p148 = pneg %p35
      %p149 = pneg %p32
      %p150 = pneg %p56
      %p151 = pneg %p53
      %p152 = pneg %p77
      %p153 = pneg %p74
      %p154 = pneg %p103
      %p155 = pneg %p100
      %p156 = scmp.lt.s32.totalorder %s14, 1
      %s157 = scalar_select %p156, %s14, 1
      %s158 = smul.addr %s157, 2
      %s159 = smul.addr %s158, 8
      %s160 = scalar_lea.vmem %s3, %s159
      %p161 = scmp.lt.s32.totalorder %s14, 1
      %s162 = scalar_select %p161, %s14, 1
      %s163 = smul.addr %s162, 18
      %s164 = smul.addr %s163, 4
      %s165 = scalar_lea.vmem %s0, %s164
      %p166 = scmp.lt.s32.totalorder %s14, 1
      %s167 = scalar_select %p166, %s14, 1
      %s168 = smul.addr %s167, 2
      %s169 = smul.addr %s168, 8
      %s170 = scalar_lea.vmem %s3, %s169
      %v172 = vld [vmem:[%s1] sm:$0xf]
      %v173 = vld [vmem:[%s2] sm:$0xff]
      %v174 = vld [vmem:[%s2 + $0x8] sm:$0xff]
      %v175 = vld [vmem:[%s2 + $0x10] sm:$0xff]
      %v176 = vld [vmem:[%s2 + $0x18] sm:$0xff]
      %v177 = vld [vmem:[%s2 + $0x20] sm:$0xff]
      %v178 = vld [vmem:[%s2 + $0x28] sm:$0xff]
      %v179 = vld [vmem:[%s165] sm:$0xff]
      %v180 = vld [vmem:[%s165 + $0x8] sm:$0xff]
      %v181 = vld [vmem:[%s165 + $0x10] sm:$0xff]
      %v182 = vld [vmem:[%s165 + $0x18] sm:$0xff]
      %v183 = vld [vmem:[%s165 + $0x20] sm:$0xff]
      %v184 = vld [vmem:[%s165 + $0x28] sm:$0xff]
      %v185 = vld [vmem:[%s165 + $0x30] sm:$0xff]
      %v186 = vld [vmem:[%s165 + $0x38] sm:$0xff]
      %v187 = vld [vmem:[%s165 + $0x40] sm:$0xff]
      %v197 = vunpack.c.l.b16 %v179
      %v198 = vunpack.c.h.b16 %v179
      %v199 = vunpack.c.l.b16 %v180
      %v200 = vunpack.c.h.b16 %v180
      %v201 = vunpack.c.l.b16 %v181
      %v202 = vunpack.c.h.b16 %v181
      %v203 = vunpack.c.l.b16 %v182
      %v204 = vunpack.c.h.b16 %v182
      %v205 = vunpack.c.l.b16 %v183
      %v206 = vunpack.c.h.b16 %v183
      %v207 = vunpack.c.l.b16 %v184
      %v208 = vunpack.c.h.b16 %v184
      %v209 = vunpack.c.l.b16 %v185
      %v210 = vunpack.c.h.b16 %v185
      %v211 = vunpack.c.l.b16 %v186
      %v212 = vunpack.c.h.b16 %v186
      %v213 = vunpack.c.l.b16 %v187
      %v214 = vunpack.c.h.b16 %v187
      %v215 = vpack.c.b16 %v199, %v197
      %v216 = vpack.c.b16 %v200, %v198
      %v217 = vpack.c.b16 %v203, %v201
      %v218 = vpack.c.b16 %v204, %v202
      %v219 = vpack.c.b16 %v207, %v205
      %v220 = vpack.c.b16 %v208, %v206
      %v221 = vpack.c.b16 %v211, %v209
      %v222 = vpack.c.b16 %v212, %v210
      %v223 = vpack.c.b16 %v213, %v213
      %v224 = vpack.c.b16 %v214, %v214
      %vm233 = vcmask 588800
      %v235 = vsel %vm233, %v172, 0
      %vm237 = vcmask 1043456
      %v239 = vsel %vm237, %v223, 0
      %v242 = vsel %vm237, %v224, 0
      %244 = vmatprep.subr.bf16.mxu0 %v216
      %245 = vmatpush1.bf16.msra.mxu0 %v215
      %246 = vmatprep.subr.bf16.mxu0 %v218
      %247 = vmatpush1.bf16.msra.mxu0 %v217
      %248 = vmatprep.subr.bf16.mxu0 %v220
      %249 = vmatpush1.bf16.msra.mxu0 %v219
      %250 = vmatprep.subr.bf16.mxu0 %v222
      %251 = vmatpush1.bf16.msra.mxu0 %v221
      %252 = vmatprep.subr.bf16.mxu0 %v242
      %253 = vmatpush1.bf16.msra.mxu0 %v239
      %254 = vmatprep.subr.bf16.mxu0 0
      %255 = vmatpush1.bf16.msra.mxu0 0
      %256 = vmatprep.subr.bf16.mxu0 0
      %257 = vmatpush1.bf16.msra.mxu0 0
      %258 = vmatprep.subr.bf16.mxu0 0
      %259 = vmatpush1.bf16.msra.mxu0 0
      %260 = vmatprep.subr.bf16.mxu0 0
      %261 = vmatpush1.bf16.msra.mxu0 0
      %262 = vmatprep.subr.bf16.mxu0 0
      %263 = vmatpush1.bf16.msra.mxu0 0
      %264 = vmatprep.subr.bf16.mxu0 0
      %265 = vmatpush1.bf16.msra.mxu0 0
      %266 = vmatprep.subr.bf16.mxu0 0
      %267 = vmatpush1.bf16.msra.mxu0 0
      %268 = vmatprep.subr.bf16.mxu0 0
      %269 = vmatpush1.bf16.msra.mxu0 0
      %270 = vmatprep.subr.bf16.mxu0 0
      %271 = vmatpush1.bf16.msra.mxu0 0
      %272 = vmatprep.subr.bf16.mxu0 0
      %273 = vmatpush1.bf16.msra.mxu0 0
      %274 = vmatprep.subr.bf16.mxu0 0
      %275 = vmatpush1.bf16.msra.mxu0 0
      %276 = vmatprep.mubr.bf16.mxu0 0
      %277 = vmatmul.mubr.bf16.gmra.mrb[0].mxu0 %v235
      %v278 = vpop.f32.mrb[0].mxu0
      %v279 = vadd.f32 %v177, %v278
      %v280 = vpop.f32.mrb[0].mxu0
      %v281 = vadd.f32 %v178, %v280
      %v282 = vpop.f32.mrb[0].mxu0
      %v283 = vpop.f32.mrb[0].mxu0
      %284 = vdwg.mxu0
      %v285 = vadd.f32 %v279, %v281
      %286 = vadd.xlane.f32.xlu0 %v285
      %v287 = vpop.xlane.xlu0 %286
      %v288 = vrot.slane %v287, 4
      %v289 = vadd.f32 %v287, %v288
      %v290 = vrot.slane %v289, 2
      %v291 = vadd.f32 %v289, %v290
      %v292 = vrot.slane %v291, 1
      %v293 = vadd.f32 %v291, %v292
      %s294 = vtos %v293
      %v295 = vrcp.pop 2048.0
      %s296 = vtos %v295
      %s297 = smul.f32 %s294, %s296
      %v298 = vmul.f32 %v279, %v279
      %v299 = vmul.f32 %v281, %v281
      %v300 = vadd.f32 %v298, %v299
      %301 = vadd.xlane.f32.xlu0 %v300
      %v302 = vpop.xlane.xlu0 %301
      %v303 = vrot.slane %v302, 4
      %v304 = vadd.f32 %v302, %v303
      %v305 = vrot.slane %v304, 2
      %v306 = vadd.f32 %v304, %v305
      %v307 = vrot.slane %v306, 1
      %v308 = vadd.f32 %v306, %v307
      %s309 = vtos %v308
      %v310 = vrcp.pop 2048.0
      %s311 = vtos %v310
      %s312 = smul.f32 %s309, %s311
      %s313 = smul.f32 %s297, %s297
      %s314 = ssub.f32 %s312, %s313
      %v315 = vstv %s297
      %v316 = vsub.f32 %v279, %v315
      %v317 = vsub.f32 %v281, %v315
      %s318 = sadd.f32 %s314, 1e-05
      %v319 = vstv %s318
      %v320 = vrsqrt.pop %v319
      %s321 = vtos %v320
      %v322 = vstv %s321
      %v323 = vmul.f32 %v316, %v322
      %v324 = vmul.f32 %v317, %v322
      %v325 = vmul.f32 %v323, %v173
      %v326 = vmul.f32 %v324, %v174
      %v327 = vadd.f32 %v325, %v175
      %v328 = vadd.f32 %v326, %v176
      %vm329 = vcmp.ge.f32.partialorder %v327, 0.0
      %vm330 = vcmp.ge.f32.partialorder %v328, 0.0
      %v331 = vmul.f32 %v327, 0.1
      %v332 = vmul.f32 %v328, 0.1
      %v333 = vsel %vm329, %v327, %v331
      %v334 = vsel %vm330, %v328, %v332
      %335 = vst [vmem:[%s170] sm:$0xff] %v333
      %336 = vst [vmem:[%s170 + $0x8] sm:$0xff] %v334
      %p337 = scmp.lt.s32.totalorder %s14, 1
      %s338 = scalar_select %p337, %s14, 1
      %s339 = smul.addr %s338, 2
      %s340 = smul.addr %s339, 8
      %s341 = scalar_lea.vmem %s3, %s340
      // Predicated region
      $region33: #{decoder_block_forward.1} parent=31 // pred_check
        %p342 = pneg %p100
      $region34: #{decoder_block_forward.1} parent=31 // pred_check_branch
        %344 = sbr.rel (%p342) target = $region36
      $region35: #{decoder_block_forward.1} parent=31 // pred_region
        _
      $region36: #{decoder_block_forward.1} parent=31 // pred_fallthru
        _
    $region32: #{decoder_block_forward.1} parent=5 // pred_fallthru
      _
    %p345 = scmp.le.s32.totalorder 2, %s9
    // Predicated region
    $region37: #{decoder_block_forward.1} parent=5 // pred_check
      %p346 = pneg %p345
    $region38: #{decoder_block_forward.1} parent=5 // pred_check_branch
      %348 = sbr.rel (%p346) target = $region40
    $region39: #{decoder_block_forward.1} parent=5 // pred_region
      %s349 = ssub.s32 %s9, 2
      // Predicated region
      $region41: #{decoder_block_forward.1} parent=39 // pred_check
        %p350 = pneg %p106
      $region42: #{decoder_block_forward.1} parent=39 // pred_check_branch
        %352 = sbr.rel (%p350) target = $region44
      $region43: #{decoder_block_forward.1} parent=39 // pred_region
        %p353 = scmp.lt.s32.totalorder %s15, 1
        %s354 = scalar_select %p353, %s15, 1
        %s355 = smul.addr %s354, 2
        %s356 = smul.addr %s355, 8
        %s357 = scalar_lea.vmem %s3, %s356
      $region44: #{decoder_block_forward.1} parent=39 // pred_fallthru
        _
    $region40: #{decoder_block_forward.1} parent=5 // pred_fallthru
      _
  $region6: #{decoder_block_forward.1} parent=0 // loop_footer
    %s13 = sadd.s32 1, %s9
  $region7: #{decoder_block_forward.1} parent=0 // loop_footer_branch
    %8 = sbr.rel target = $region3
  $region8: #{decoder_block_forward.1} parent=0 // loop_exit
    _

</llo_original>
